<compile_context>
chip_gen: v6e
topology: v6e:2x2x1
jax: 0.10.0
libtpu: 0.0.40
codegen_flags: <defaults>
</compile_context>

<pallas_src>
import jax
import jax.numpy as jnp
import numpy as np
from jax.experimental import pallas as pl
from jax.experimental.pallas import tpu as pltpu

_F32 = jnp.float32
_BF16 = jnp.bfloat16
_LN_EPS = 1e-5


# ----------------------------- Pallas kernels ------------------------------


def _actor_gcn_kernel(ma_ref, src_ref, dst_ref, x_ref, wg_ref, bg_ref,
                      gamma_ref, beta_ref, w2_ref, b2_ref, w3_ref, b3_ref,
                      out_ref):
    n = x_ref.shape[0]
    e = src_ref.shape[1]

    # One-hot edge masks built directly in bf16 (exact for small edge counts).
    node_ids = jax.lax.broadcasted_iota(jnp.int32, (n, e), 0)
    d_oh = (node_ids == dst_ref[...]).astype(_BF16)          # (N, E) onto dst
    s_oh = (node_ids == src_ref[...]).astype(_BF16)          # (N, E) from src

    # Symmetric GCN normalization D^-1/2 (A+I) D^-1/2 applied via row scaling:
    # deg = in-degree + 1 (self-loop), A_hat @ X == dinv * ((A+I) @ (dinv*X)).
    deg = jnp.sum(d_oh, axis=1, keepdims=True, dtype=_F32) + 1.0   # (N, 1)
    dinv = jax.lax.rsqrt(deg)
    xs = x_ref[...] * dinv                                   # (N, F) f32
    xs_b = xs.astype(_BF16)

    # Reassociated aggregation (no dense NxN adjacency):
    #   msg = s_oh^T @ xs  -> (E, F)  (gather x[src[e]])
    #   agg = d_oh @ msg   -> (N, F)  (scatter-add onto dst), + xs self-loop.
    msg = jax.lax.dot_general(s_oh, xs_b, (((0,), (0,)), ((), ())),
                              preferred_element_type=_F32)   # (E, F)
    agg = jnp.dot(d_oh, msg.astype(_BF16),
                  preferred_element_type=_F32) + xs          # (N, F)
    ax = agg * dinv

    # GCNConv projection (A_hat @ X) @ Wg + bg, ReLU.  wg is pre-cast bf16.
    h = jnp.dot(ax.astype(_BF16), wg_ref[...],
                preferred_element_type=_F32) + bg_ref[...]
    h = jnp.maximum(h, 0.0)

    # torch_geometric LayerNorm, mode='graph', batch=None:
    # single mean/std over all nodes*channels, then per-channel affine.
    nh = float(n * h.shape[1])
    mu = jnp.sum(jnp.sum(h, axis=1, keepdims=True), axis=0,
                 keepdims=True) * (1.0 / nh)
    var = jnp.sum(jnp.sum((h - mu) ** 2, axis=1, keepdims=True), axis=0,
                  keepdims=True) * (1.0 / nh)
    inv = pl.reciprocal(jnp.sqrt(var) + _LN_EPS, approx=True)   # EUP slot
    hn = (h - mu) * inv * gamma_ref[...] + beta_ref[...]

    # global_add_pool with batch index all zeros -> sum over nodes, (1, H).
    pooled = jnp.sum(hn, axis=0, keepdims=True)

    # l2 -> ReLU -> l3 -> tanh -> scale by max_action (SMEM scalar).
    a2 = jnp.dot(pooled.astype(_BF16), w2_ref[...],
                 preferred_element_type=_F32) + b2_ref[...]
    a2 = jnp.maximum(a2, 0.0)
    a3 = jnp.dot(a2.astype(_BF16), w3_ref[...],
                 preferred_element_type=_F32) + b3_ref[...]
    out_ref[...] = (ma_ref[0] * jnp.tanh(a3)).astype(out_ref.dtype)


def _actor_linear_kernel(ma_ref, st_ref, w1t_ref, b1_ref, w2t_ref, b2_ref,
                         w3t_ref, b3_ref, out_ref):
    # Transposed layout: batch on lanes.  st is (S2, B) bf16, weights are
    # pre-transposed bf16 (out_dim, in_dim), biases are f32 columns (out_dim,1).
    h1 = jnp.dot(w1t_ref[...], st_ref[...],
                 preferred_element_type=_F32) + b1_ref[...]        # (H, B)
    h1 = jnp.maximum(h1, 0.0)
    h2 = jnp.dot(w2t_ref[...], h1.astype(_BF16),
                 preferred_element_type=_F32) + b2_ref[...]        # (H, B)
    h2 = jnp.maximum(h2, 0.0)
    h3 = jnp.dot(w3t_ref[...], h2.astype(_BF16),
                 preferred_element_type=_F32) + b3_ref[...]        # (A, B)
    out_ref[...] = (ma_ref[0] * jnp.tanh(h3)).astype(out_ref.dtype)


# ------------------------------ JAX wrappers --------------------------------

_SMEM = pl.BlockSpec(memory_space=pltpu.MemorySpace.SMEM)
_VMEM = pl.BlockSpec(memory_space=pltpu.MemorySpace.VMEM)


def actor_forward_gcn(params, x, edge_index, max_action):
    """Default forward: GCNConv -> LN(graph) -> global_add_pool -> l2 -> l3."""
    action_dim = params["w3"].shape[1]
    src = edge_index[0].reshape(1, -1).astype(jnp.int32)
    dst = edge_index[1].reshape(1, -1).astype(jnp.int32)
    ma = jnp.full((1,), max_action, _F32)

    args = (ma, src, dst, x,
            params["wg"].astype(_BF16), params["bg"],
            params["gamma"], params["beta"],
            params["w2"].astype(_BF16), params["b2"],
            params["w3"].astype(_BF16), params["b3"])
    return pl.pallas_call(
        _actor_gcn_kernel,
        out_shape=jax.ShapeDtypeStruct((1, action_dim), _F32),
        in_specs=[_SMEM] + [_VMEM] * (len(args) - 1),
        out_specs=_VMEM,
    )(*args)


def actor_forward_linear(params, state, max_action):
    """is_linear=True branch: single grid-less call, batch on the lane dim."""
    b, _ = state.shape
    action_dim = params["w3"].shape[1]
    ma = jnp.full((1,), max_action, _F32)

    st = state.T.astype(_BF16)                          # (S2, B)
    w1t = params["w1"].T.astype(_BF16)                  # (H, S2)
    w2t = params["w2"].T.astype(_BF16)                  # (H, H)
    w3t = params["w3"].T.astype(_BF16)                  # (A, H)
    b1c = params["b1"].reshape(-1, 1)                   # (H, 1) f32
    b2c = params["b2"].reshape(-1, 1)
    b3c = params["b3"].reshape(-1, 1)

    out_t = pl.pallas_call(
        _actor_linear_kernel,
        out_shape=jax.ShapeDtypeStruct((action_dim, b), _F32),
        in_specs=[_SMEM] + [_VMEM] * 7,
        out_specs=_VMEM,
    )(ma, st, w1t, b1c, w2t, b2c, w3t, b3c)
    return out_t.T                                      # (B, A)


# ------------------------------ references ----------------------------------
# Pure-JAX references mirroring the kernel math (same bf16 dot operands, f32
# accumulation, graph-mode LN) so the correctness check is tight.


def _reference_gcn(params, x, edge_index, max_action):
    n = x.shape[0]
    src, dst = edge_index[0], edge_index[1]
    adj = jnp.zeros((n, n), _F32).at[dst, src].add(1.0)
    deg = jnp.sum(adj, axis=1, keepdims=True) + 1.0
    dinv = 1.0 / jnp.sqrt(deg)
    xs = x * dinv
    ax = (jnp.dot(adj.astype(_BF16), xs.astype(_BF16),
                  preferred_element_type=_F32) + xs) * dinv
    h = jnp.dot(ax.astype(_BF16), params["wg"].astype(_BF16),
                preferred_element_type=_F32) + params["bg"]
    h = jnp.maximum(h, 0.0)
    mu = jnp.mean(h)
    std = jnp.sqrt(jnp.mean((h - mu) ** 2))
    hn = (h - mu) / (std + _LN_EPS) * params["gamma"] + params["beta"]
    pooled = jnp.sum(hn, axis=0, keepdims=True)
    a2 = jnp.maximum(
        jnp.dot(pooled.astype(_BF16), params["w2"].astype(_BF16),
                preferred_element_type=_F32) + params["b2"], 0.0)
    a3 = jnp.dot(a2.astype(_BF16), params["w3"].astype(_BF16),
                 preferred_element_type=_F32) + params["b3"]
    return max_action * jnp.tanh(a3)


def _reference_linear(params, state, max_action):
    h1 = jnp.maximum(
        jnp.dot(state.astype(_BF16), params["w1"].astype(_BF16),
                preferred_element_type=_F32) + params["b1"], 0.0)
    h2 = jnp.maximum(
        jnp.dot(h1.astype(_BF16), params["w2"].astype(_BF16),
                preferred_element_type=_F32) + params["b2"], 0.0)
    h3 = jnp.dot(h2.astype(_BF16), params["w3"].astype(_BF16),
                 preferred_element_type=_F32) + params["b3"]
    return max_action * jnp.tanh(h3)


# -------------------------------- main --------------------------------------


def init_params(key, state_dim, state_dim_2, hidden_dim, action_dim):
    ks = jax.random.split(key, 8)
    scale = 0.1
    return {
        # GCNConv(state_dim, hidden_dim): weight stored (in, out) + bias row.
        "wg": scale * jax.random.normal(ks[0], (state_dim, hidden_dim), _F32),
        "bg": scale * jax.random.normal(ks[1], (1, hidden_dim), _F32),
        # LayerNorm(hidden_dim) affine params.
        "gamma": jnp.ones((1, hidden_dim), _F32),
        "beta": jnp.zeros((1, hidden_dim), _F32),
        # l1: Linear(state_dim_2, hidden_dim)
        "w1": scale * jax.random.normal(ks[2], (state_dim_2, hidden_dim), _F32),
        "b1": scale * jax.random.normal(ks[3], (1, hidden_dim), _F32),
        # l2: Linear(hidden_dim, hidden_dim)
        "w2": scale * jax.random.normal(ks[4], (hidden_dim, hidden_dim), _F32),
        "b2": scale * jax.random.normal(ks[5], (1, hidden_dim), _F32),
        # l3: Linear(hidden_dim, action_dim)
        "w3": scale * jax.random.normal(ks[6], (hidden_dim, action_dim), _F32),
        "b3": scale * jax.random.normal(ks[7], (1, action_dim), _F32),
    }


if __name__ == "__main__":
    key = jax.random.PRNGKey(0)
    kx, kp, ks = jax.random.split(key, 3)

    num_nodes = 8        # graph with 8 nodes
    state_dim = 4        # GCN node-feature dim
    state_dim_2 = 6      # flat-state dim for the linear branch
    hidden_dim = 32
    action_dim = 4
    max_action = 2.0
    batch = 256          # batched states for the linear branch (lanes = batch)

    params = init_params(kp, state_dim, state_dim_2, hidden_dim, action_dim)

    # Node features and a bidirectional ring graph (2, E) edge_index.
    x = jax.random.normal(kx, (num_nodes, state_dim), _F32)
    s = np.arange(num_nodes)
    d = (s + 1) % num_nodes
    edge_index = jnp.asarray(
        np.stack([np.concatenate([s, d]), np.concatenate([d, s])]),
        dtype=jnp.int32)

    # Batched flat states for the is_linear=True branch.
    state = jax.random.normal(ks, (batch, state_dim_2), _F32)

    # GCN path (default forward).
    out_gcn = jax.block_until_ready(
        actor_forward_gcn(params, x, edge_index, max_action))
    # Linear path.
    out_lin = jax.block_until_ready(
        actor_forward_linear(params, state, max_action))

    ref_gcn = jax.block_until_ready(
        _reference_gcn(params, x, edge_index, max_action))
    ref_lin = jax.block_until_ready(
        _reference_linear(params, state, max_action))

    assert out_gcn.shape == (1, action_dim)
    assert out_lin.shape == (batch, action_dim)
    np.testing.assert_allclose(np.asarray(out_gcn), np.asarray(ref_gcn),
                               rtol=1e-2, atol=1e-2)
    np.testing.assert_allclose(np.asarray(out_lin), np.asarray(ref_lin),
                               rtol=1e-2, atol=1e-2)

    print("KERNEL_OK")
</pallas_src>

<mosaic_0001>
module attributes {stable_mosaic.version = 11 : i64} {
  func.func @_actor_gcn_kernel(%arg0: memref<1xf32, #tpu.memory_space<smem>>, %arg1: memref<1x16xi32, #tpu.memory_space<vmem>>, %arg2: memref<1x16xi32, #tpu.memory_space<vmem>>, %arg3: memref<8x4xf32, #tpu.memory_space<vmem>>, %arg4: memref<4x32xbf16, #tpu.memory_space<vmem>>, %arg5: memref<1x32xf32, #tpu.memory_space<vmem>>, %arg6: memref<1x32xf32, #tpu.memory_space<vmem>>, %arg7: memref<1x32xf32, #tpu.memory_space<vmem>>, %arg8: memref<32x32xbf16, #tpu.memory_space<vmem>>, %arg9: memref<1x32xf32, #tpu.memory_space<vmem>>, %arg10: memref<32x4xbf16, #tpu.memory_space<vmem>>, %arg11: memref<1x4xf32, #tpu.memory_space<vmem>>, %arg12: memref<1x4xf32, #tpu.memory_space<vmem>>) attributes {dimension_semantics = [], scalar_prefetch = 0 : i64, scratch_operands = 0 : i64, tpu.core_type = #tpu.core_type<tc>} {
    %0 = tpu.iota {dimensions = array<i32: 0>} : vector<8x16xi32>
    %c0 = arith.constant 0 : index
    %c0_0 = arith.constant 0 : index
    %1 = vector.load %arg2[%c0, %c0_0] : memref<1x16xi32, #tpu.memory_space<vmem>>, vector<1x16xi32>
    %2 = vector.broadcast %1 : vector<1x16xi32> to vector<8x16xi32>
    %3 = arith.cmpi eq, %0, %2 : vector<8x16xi32>
    %4 = arith.extui %3 : vector<8x16xi1> to vector<8x16xi32>
    %5 = arith.sitofp %4 : vector<8x16xi32> to vector<8x16xf32>
    %6 = arith.truncf %5 : vector<8x16xf32> to vector<8x16xbf16>
    %c0_1 = arith.constant 0 : index
    %c0_2 = arith.constant 0 : index
    %7 = vector.load %arg1[%c0_1, %c0_2] : memref<1x16xi32, #tpu.memory_space<vmem>>, vector<1x16xi32>
    %8 = vector.broadcast %7 : vector<1x16xi32> to vector<8x16xi32>
    %9 = arith.cmpi eq, %0, %8 : vector<8x16xi32>
    %10 = arith.extui %9 : vector<8x16xi1> to vector<8x16xi32>
    %11 = arith.sitofp %10 : vector<8x16xi32> to vector<8x16xf32>
    %12 = arith.truncf %11 : vector<8x16xf32> to vector<8x16xbf16>
    %13 = arith.extf %6 : vector<8x16xbf16> to vector<8x16xf32>
    %cst = arith.constant dense<0.000000e+00> : vector<8xf32>
    %14 = vector.multi_reduction <add>, %13, %cst [1] : vector<8x16xf32> to vector<8xf32>
    %15 = vector.shape_cast %14 : vector<8xf32> to vector<8x1xf32>
    %cst_3 = arith.constant 1.000000e+00 : f32
    %16 = vector.broadcast %cst_3 : f32 to vector<8x1xf32>
    %17 = arith.addf %15, %16 : vector<8x1xf32>
    %18 = math.rsqrt %17 : vector<8x1xf32>
    %c0_4 = arith.constant 0 : index
    %c0_5 = arith.constant 0 : index
    %19 = vector.load %arg3[%c0_4, %c0_5] : memref<8x4xf32, #tpu.memory_space<vmem>>, vector<8x4xf32>
    %20 = vector.broadcast %18 : vector<8x1xf32> to vector<8x4xf32>
    %21 = arith.mulf %19, %20 : vector<8x4xf32>
    %22 = arith.truncf %21 : vector<8x4xf32> to vector<8x4xbf16>
    %cst_6 = arith.constant dense<0.000000e+00> : vector<16x4xf32>
    %23 = tpu.matmul %12, %22, %cst_6 {dimension_numbers = #tpu.dot_dimension_numbers<[0], [0], [1], [1], [0, 1, 1, 1], [], []>} : vector<8x16xbf16>, vector<8x4xbf16>, vector<16x4xf32> -> vector<16x4xf32>
    %24 = arith.truncf %23 : vector<16x4xf32> to vector<16x4xbf16>
    %cst_7 = arith.constant dense<0.000000e+00> : vector<8x4xf32>
    %25 = tpu.matmul %6, %24, %cst_7 {dimension_numbers = #tpu.dot_dimension_numbers<[1], [0], [0], [1], [0, 0, 1, 1], [], []>} : vector<8x16xbf16>, vector<16x4xbf16>, vector<8x4xf32> -> vector<8x4xf32>
    %26 = arith.addf %25, %21 : vector<8x4xf32>
    %27 = vector.broadcast %18 : vector<8x1xf32> to vector<8x4xf32>
    %28 = arith.mulf %26, %27 : vector<8x4xf32>
    %29 = arith.truncf %28 : vector<8x4xf32> to vector<8x4xbf16>
    %c0_8 = arith.constant 0 : index
    %c0_9 = arith.constant 0 : index
    %30 = vector.load %arg4[%c0_8, %c0_9] : memref<4x32xbf16, #tpu.memory_space<vmem>>, vector<4x32xbf16>
    %cst_10 = arith.constant dense<0.000000e+00> : vector<8x32xf32>
    %31 = tpu.matmul %29, %30, %cst_10 {dimension_numbers = #tpu.dot_dimension_numbers<[1], [0], [0], [1], [0, 0, 1, 1], [], []>} : vector<8x4xbf16>, vector<4x32xbf16>, vector<8x32xf32> -> vector<8x32xf32>
    %c0_11 = arith.constant 0 : index
    %c0_12 = arith.constant 0 : index
    %32 = vector.load %arg5[%c0_11, %c0_12] : memref<1x32xf32, #tpu.memory_space<vmem>>, vector<1x32xf32>
    %33 = vector.broadcast %32 : vector<1x32xf32> to vector<8x32xf32>
    %34 = arith.addf %31, %33 : vector<8x32xf32>
    %cst_13 = arith.constant 0.000000e+00 : f32
    %35 = vector.broadcast %cst_13 : f32 to vector<8x32xf32>
    %36 = arith.maximumf %34, %35 : vector<8x32xf32>
    %cst_14 = arith.constant dense<0.000000e+00> : vector<8xf32>
    %37 = vector.multi_reduction <add>, %36, %cst_14 [1] : vector<8x32xf32> to vector<8xf32>
    %38 = vector.shape_cast %37 : vector<8xf32> to vector<8x1xf32>
    %cst_15 = arith.constant dense<0.000000e+00> : vector<1xf32>
    %39 = vector.multi_reduction <add>, %38, %cst_15 [0] : vector<8x1xf32> to vector<1xf32>
    %40 = vector.shape_cast %39 : vector<1xf32> to vector<1x1xf32>
    %cst_16 = arith.constant 3.906250e-03 : f32
    %41 = vector.broadcast %cst_16 : f32 to vector<1x1xf32>
    %42 = arith.mulf %40, %41 : vector<1x1xf32>
    %43 = vector.broadcast %42 : vector<1x1xf32> to vector<8x32xf32>
    %44 = arith.subf %36, %43 : vector<8x32xf32>
    %45 = arith.mulf %44, %44 : vector<8x32xf32>
    %cst_17 = arith.constant dense<0.000000e+00> : vector<8xf32>
    %46 = vector.multi_reduction <add>, %45, %cst_17 [1] : vector<8x32xf32> to vector<8xf32>
    %47 = vector.shape_cast %46 : vector<8xf32> to vector<8x1xf32>
    %cst_18 = arith.constant dense<0.000000e+00> : vector<1xf32>
    %48 = vector.multi_reduction <add>, %47, %cst_18 [0] : vector<8x1xf32> to vector<1xf32>
    %49 = vector.shape_cast %48 : vector<1xf32> to vector<1x1xf32>
    %cst_19 = arith.constant 3.906250e-03 : f32
    %50 = vector.broadcast %cst_19 : f32 to vector<1x1xf32>
    %51 = arith.mulf %49, %50 : vector<1x1xf32>
    %52 = math.sqrt %51 : vector<1x1xf32>
    %cst_20 = arith.constant 9.99999974E-6 : f32
    %53 = vector.broadcast %cst_20 : f32 to vector<1x1xf32>
    %54 = arith.addf %52, %53 : vector<1x1xf32>
    %55 = tpu.reciprocal %54 {approx = true} : vector<1x1xf32> -> vector<1x1xf32>
    %56 = vector.broadcast %42 : vector<1x1xf32> to vector<8x32xf32>
    %57 = arith.subf %36, %56 : vector<8x32xf32>
    %58 = vector.broadcast %55 : vector<1x1xf32> to vector<8x32xf32>
    %59 = arith.mulf %57, %58 : vector<8x32xf32>
    %c0_21 = arith.constant 0 : index
    %c0_22 = arith.constant 0 : index
    %60 = vector.load %arg6[%c0_21, %c0_22] : memref<1x32xf32, #tpu.memory_space<vmem>>, vector<1x32xf32>
    %61 = vector.broadcast %60 : vector<1x32xf32> to vector<8x32xf32>
    %62 = arith.mulf %59, %61 : vector<8x32xf32>
    %c0_23 = arith.constant 0 : index
    %c0_24 = arith.constant 0 : index
    %63 = vector.load %arg7[%c0_23, %c0_24] : memref<1x32xf32, #tpu.memory_space<vmem>>, vector<1x32xf32>
    %64 = vector.broadcast %63 : vector<1x32xf32> to vector<8x32xf32>
    %65 = arith.addf %62, %64 : vector<8x32xf32>
    %cst_25 = arith.constant dense<0.000000e+00> : vector<32xf32>
    %66 = vector.multi_reduction <add>, %65, %cst_25 [0] : vector<8x32xf32> to vector<32xf32>
    %67 = vector.shape_cast %66 : vector<32xf32> to vector<1x32xf32>
    %68 = arith.truncf %67 : vector<1x32xf32> to vector<1x32xbf16>
    %c0_26 = arith.constant 0 : index
    %c0_27 = arith.constant 0 : index
    %69 = vector.load %arg8[%c0_26, %c0_27] : memref<32x32xbf16, #tpu.memory_space<vmem>>, vector<32x32xbf16>
    %cst_28 = arith.constant dense<0.000000e+00> : vector<1x32xf32>
    %70 = tpu.matmul %68, %69, %cst_28 {dimension_numbers = #tpu.dot_dimension_numbers<[1], [0], [0], [1], [0, 0, 1, 1], [], []>} : vector<1x32xbf16>, vector<32x32xbf16>, vector<1x32xf32> -> vector<1x32xf32>
    %c0_29 = arith.constant 0 : index
    %c0_30 = arith.constant 0 : index
    %71 = vector.load %arg9[%c0_29, %c0_30] : memref<1x32xf32, #tpu.memory_space<vmem>>, vector<1x32xf32>
    %72 = arith.addf %70, %71 : vector<1x32xf32>
    %cst_31 = arith.constant 0.000000e+00 : f32
    %73 = vector.broadcast %cst_31 : f32 to vector<1x32xf32>
    %74 = arith.maximumf %72, %73 : vector<1x32xf32>
    %75 = arith.truncf %74 : vector<1x32xf32> to vector<1x32xbf16>
    %c0_32 = arith.constant 0 : index
    %c0_33 = arith.constant 0 : index
    %76 = vector.load %arg10[%c0_32, %c0_33] : memref<32x4xbf16, #tpu.memory_space<vmem>>, vector<32x4xbf16>
    %cst_34 = arith.constant dense<0.000000e+00> : vector<1x4xf32>
    %77 = tpu.matmul %75, %76, %cst_34 {dimension_numbers = #tpu.dot_dimension_numbers<[1], [0], [0], [1], [0, 0, 1, 1], [], []>} : vector<1x32xbf16>, vector<32x4xbf16>, vector<1x4xf32> -> vector<1x4xf32>
    %c0_35 = arith.constant 0 : index
    %c0_36 = arith.constant 0 : index
    %78 = vector.load %arg11[%c0_35, %c0_36] : memref<1x4xf32, #tpu.memory_space<vmem>>, vector<1x4xf32>
    %79 = arith.addf %77, %78 : vector<1x4xf32>
    %c0_37 = arith.constant 0 : index
    %80 = memref.load %arg0[%c0_37] : memref<1xf32, #tpu.memory_space<smem>>
    %81 = math.tanh %79 : vector<1x4xf32>
    %82 = vector.broadcast %80 : f32 to vector<1x4xf32>
    %83 = arith.mulf %82, %81 : vector<1x4xf32>
    %c0_38 = arith.constant 0 : index
    %c0_39 = arith.constant 0 : index
    %84 = vector.load %arg12[%c0_38, %c0_39] : memref<1x4xf32, #tpu.memory_space<vmem>>, vector<1x4xf32>
    tpu.vector_store %arg12[%c0_38, %c0_39], %83 {strides = array<i32>} : memref<1x4xf32, #tpu.memory_space<vmem>>, vector<1x4xf32>,
    return
  }
}

</mosaic_0001>

<llo_original>
// kernel: tpu_custom_call.1
$region0: #{tpu_custom_call.1}
  #allocation0 [shape = 'u32[]', space=smem, size = 0x4, offset = 0x4, fixed_abs, tag = 'smem constant byte address 0x4 - core index']
  #allocation1 [shape = 'u32[144,128]{1,0:T(1,128)}', space=vmem, size = 0x12000, scoped, tag = 'internal scratch']
  #allocation2 [shape = 'f32[1]{0:T(128)S(6)}', space=smem, size = 0x200, scoped, tag = 'scoped memory for tpu_custom_call.1']
  %s0 = inlined_call_operand.<no memory space> [shape: f32[1], index: 0, kind: input, shape index: {}]
  %s1 = inlined_call_operand.vmem [shape: s32[1,16], index: 1, kind: input, shape index: {}]
  %s2 = inlined_call_operand.vmem [shape: s32[1,16], index: 2, kind: input, shape index: {}]
  %s3 = inlined_call_operand.vmem [shape: f32[8,4], index: 3, kind: input, shape index: {}]
  %s4 = inlined_call_operand.vmem [shape: bf16[4,32], index: 4, kind: input, shape index: {}]
  %s5 = inlined_call_operand.vmem [shape: f32[1,32], index: 5, kind: input, shape index: {}]
  %s6 = inlined_call_operand.vmem [shape: f32[1,32], index: 6, kind: input, shape index: {}]
  %s7 = inlined_call_operand.vmem [shape: f32[1,32], index: 7, kind: input, shape index: {}]
  %s8 = inlined_call_operand.vmem [shape: bf16[32,32], index: 8, kind: input, shape index: {}]
  %s9 = inlined_call_operand.vmem [shape: f32[1,32], index: 9, kind: input, shape index: {}]
  %s10 = inlined_call_operand.vmem [shape: bf16[32,4], index: 10, kind: input, shape index: {}]
  %s11 = inlined_call_operand.vmem [shape: f32[1,4], index: 11, kind: input, shape index: {}]
  %s12 = inlined_call_operand.hbm [shape: f32[1,4], index: 12, kind: output, shape index: {}]
  %s13 = sld [smem:[#allocation0]]
  $region58: #{tpu_custom_call.1} parent=0
    _
  %s15 = ssub.s32 1, %s13
  %s16 = scalar_select 0, %s15, %s13
  %17 = sst [smem:[#allocation2]] %s0
  $region1: #{tpu_custom_call.1} parent=0
    #allocation3 [shape = 'u8[512]{0}', space=vmem, size = 0x400, scoped, tag = 'output window, operand 0, single buffered']
    #allocation4 [shape = 's32[1]{0}', space=sflag, size = 0x4, scoped, tag = 'scoped memory for tpu_custom_call.1']
    %18 = vsyncpa [#allocation4], 0
    // Predicated region
    $region2: #{tpu_custom_call.1} parent=1 // pred_check
      _
    $region3: #{tpu_custom_call.1} parent=1 // pred_check_branch
      %20 = sbr.rel (0) target = $region5
    $region4: #{tpu_custom_call.1} parent=1 // pred_region
      _
    $region5: #{tpu_custom_call.1} parent=1 // pred_fallthru
      _
    // Predicated region
    $region6: #{tpu_custom_call.1} parent=1 // pred_check
      _
    $region7: #{tpu_custom_call.1} parent=1 // pred_check_branch
      %22 = sbr.rel (0) target = $region9
    $region8: #{tpu_custom_call.1} parent=1 // pred_region
      _
    $region9: #{tpu_custom_call.1} parent=1 // pred_fallthru
      _
    // Predicated region
    $region10: #{tpu_custom_call.1} parent=1 // pred_check
      _
    $region11: #{tpu_custom_call.1} parent=1 // pred_check_branch
      %24 = sbr.rel (0) target = $region13
    $region12: #{tpu_custom_call.1} parent=1 // pred_region
      _
    $region13: #{tpu_custom_call.1} parent=1 // pred_fallthru
      _
    // Predicated region
    $region14: #{tpu_custom_call.1} parent=1 // pred_check
      _
    $region15: #{tpu_custom_call.1} parent=1 // pred_check_branch
      %26 = sbr.rel (0) target = $region17
    $region16: #{tpu_custom_call.1} parent=1 // pred_region
      _
    $region17: #{tpu_custom_call.1} parent=1 // pred_fallthru
      _
    // Predicated region
    $region18: #{tpu_custom_call.1} parent=1 // pred_check
      _
    $region19: #{tpu_custom_call.1} parent=1 // pred_check_branch
      %28 = sbr.rel (0) target = $region21
    $region20: #{tpu_custom_call.1} parent=1 // pred_region
      _
    $region21: #{tpu_custom_call.1} parent=1 // pred_fallthru
      _
    // Predicated region
    $region22: #{tpu_custom_call.1} parent=1 // pred_check
      _
    $region23: #{tpu_custom_call.1} parent=1 // pred_check_branch
      %30 = sbr.rel (0) target = $region25
    $region24: #{tpu_custom_call.1} parent=1 // pred_region
      _
    $region25: #{tpu_custom_call.1} parent=1 // pred_fallthru
      _
    // Predicated region
    $region26: #{tpu_custom_call.1} parent=1 // pred_check
      _
    $region27: #{tpu_custom_call.1} parent=1 // pred_check_branch
      %32 = sbr.rel (0) target = $region29
    $region28: #{tpu_custom_call.1} parent=1 // pred_region
      _
    $region29: #{tpu_custom_call.1} parent=1 // pred_fallthru
      _
    // Predicated region
    $region30: #{tpu_custom_call.1} parent=1 // pred_check
      _
    $region31: #{tpu_custom_call.1} parent=1 // pred_check_branch
      %34 = sbr.rel (0) target = $region33
    $region32: #{tpu_custom_call.1} parent=1 // pred_region
      _
    $region33: #{tpu_custom_call.1} parent=1 // pred_fallthru
      _
    // Predicated region
    $region34: #{tpu_custom_call.1} parent=1 // pred_check
      _
    $region35: #{tpu_custom_call.1} parent=1 // pred_check_branch
      %36 = sbr.rel (0) target = $region37
    $region36: #{tpu_custom_call.1} parent=1 // pred_region
      _
    $region37: #{tpu_custom_call.1} parent=1 // pred_fallthru
      _
    // Predicated region
    $region38: #{tpu_custom_call.1} parent=1 // pred_check
      _
    $region39: #{tpu_custom_call.1} parent=1 // pred_check_branch
      %38 = sbr.rel (0) target = $region41
    $region40: #{tpu_custom_call.1} parent=1 // pred_region
      _
    $region41: #{tpu_custom_call.1} parent=1 // pred_fallthru
      _
    // Predicated region
    $region42: #{tpu_custom_call.1} parent=1 // pred_check
      _
    $region43: #{tpu_custom_call.1} parent=1 // pred_check_branch
      %40 = sbr.rel (0) target = $region45
    $region44: #{tpu_custom_call.1} parent=1 // pred_region
      _
    $region45: #{tpu_custom_call.1} parent=1 // pred_fallthru
      _
    // Predicated region
    $region46: #{tpu_custom_call.1} parent=1 // pred_check
      _
    $region47: #{tpu_custom_call.1} parent=1 // pred_check_branch
      %42 = sbr.rel (0) target = $region49
    $region48: #{tpu_custom_call.1} parent=1 // pred_region
      _
    $region49: #{tpu_custom_call.1} parent=1 // pred_fallthru
      _
    %v44 = vlaneseq
    %v45 = vshrl.u32 %v44, 7
    %v46 = vld [vmem:[%s2] sm:$0x1]
    %v47 = vlaneseq
    %v48 = vshrl.u32 %v47, 7
    %v49 = vsub.s32 0, %v48
    %v50 = vrot.slane %v46, %v49
    %vm51 = vcmp.eq.s32.totalorder %v45, %v50
    %v52 = vsel %vm51, 1, 0
    %v53 = vcvt.s32.f32 %v52
    %v54 = vpack.c.bf16 %v53, %v53
    %v55 = vld [vmem:[%s1] sm:$0x1]
    %v56 = vlaneseq
    %v57 = vshrl.u32 %v56, 7
    %v58 = vsub.s32 0, %v57
    %v59 = vrot.slane %v55, %v58
    %vm60 = vcmp.eq.s32.totalorder %v45, %v59
    %v61 = vsel %vm60, 1, 0
    %v62 = vcvt.s32.f32 %v61
    %v63 = vpack.c.bf16 %v62, %v62
    %v64 = vunpack.c.l.bf16 %v54
    %vm65 = vcmask 130048
    %v66 = vsel %vm65, %v64, 0.0
    %67 = vadd.xlane.f32.xlu0 %v66
    %v68 = vpop.xlane.xlu0 %67
    %v69 = vadd.f32 %v68, 1.0
    %v70 = vrsqrt.pop %v69
    %v71 = vld [vmem:[%s3] sm:$0xff]
    %v72 = vmul.f32 %v71, %v70
    %v73 = vpack.c.bf16 %v72, %v72
    %74 = vxpose.xlu0.c.b16.start [1/8] %v63, 128
    %75 = vxpose.xlu0.c.b16.cont [2/8] 0, 128
    %76 = vxpose.xlu0.c.b16.cont [3/8] 0, 128
    %77 = vxpose.xlu0.c.b16.cont [4/8] 0, 128
    %78 = vxpose.xlu0.c.b16.cont [5/8] 0, 128
    %79 = vxpose.xlu0.c.b16.cont [6/8] 0, 128
    %80 = vxpose.xlu0.c.b16.cont [7/8] 0, 128
    %81 = vxpose.xlu0.c.b16.end [8/8] 0, 128
    %v82 = vpop.trf.xlu0
    %v83 = vpop.trf.xlu0
    %v84 = vpop.trf.xlu0
    %v85 = vpop.trf.xlu0
    %v86 = vpop.trf.xlu0
    %v87 = vpop.trf.xlu0
    %v88 = vpop.trf.xlu0
    %v89 = vpop.trf.xlu0
    %vm90 = vcmask 64512
    %v92 = vsel %vm90, %v82, 0
    %vm94 = vcmask 1043456
    %v96 = vsel %vm94, %v73, 0
    %98 = vmatprep.subr.bf16.mxu0 0
    %99 = vmatpush1.bf16.msra.mxu0 0
    %100 = vmatprep.subr.bf16.mxu0 0
    %101 = vmatpush1.bf16.msra.mxu0 0
    %102 = vmatprep.subr.bf16.mxu0 0
    %103 = vmatpush1.bf16.msra.mxu0 0
    %104 = vmatprep.subr.bf16.mxu0 0
    %105 = vmatpush1.bf16.msra.mxu0 0
    %106 = vmatprep.subr.bf16.mxu0 0
    %107 = vmatpush1.bf16.msra.mxu0 0
    %108 = vmatprep.subr.bf16.mxu0 0
    %109 = vmatpush1.bf16.msra.mxu0 0
    %110 = vmatprep.subr.bf16.mxu0 0
    %111 = vmatpush1.bf16.msra.mxu0 0
    %112 = vmatprep.subr.bf16.mxu0 0
    %113 = vmatpush1.bf16.msra.mxu0 %v96
    %114 = vmatprep.subr.bf16.mxu0 0
    %115 = vmatpush2.bf16.msra.mxu0 0
    %116 = vmatprep.subr.bf16.mxu0 0
    %117 = vmatpush2.bf16.msra.mxu0 0
    %118 = vmatprep.subr.bf16.mxu0 0
    %119 = vmatpush2.bf16.msra.mxu0 0
    %120 = vmatprep.subr.bf16.mxu0 0
    %121 = vmatpush2.bf16.msra.mxu0 0
    %122 = vmatprep.subr.bf16.mxu0 0
    %123 = vmatpush2.bf16.msra.mxu0 0
    %124 = vmatprep.subr.bf16.mxu0 0
    %125 = vmatpush2.bf16.msra.mxu0 0
    %126 = vmatprep.subr.bf16.mxu0 0
    %127 = vmatpush2.bf16.msra.mxu0 0
    %128 = vmatprep.subr.bf16.mxu0 0
    %129 = vmatpush2.bf16.msra.mxu0 0
    %130 = vmatprep.mubr.bf16.mxu0 0
    %131 = vmatmul.mubr.bf16.gmra.mxu0 %v92
    %v132 = vpop.f32.mrf.mxu0
    %v133 = vadd.f32 0.0, %v132
    %v134 = vpop.f32.mrf.mxu0
    %v135 = vpop.f32.mrf.mxu0
    %v136 = vadd.f32 0.0, %v135
    %v137 = vpop.f32.mrf.mxu0
    %138 = vdwg.mxu0
    %v139 = vpack.c.bf16 %v136, %v133
    %v141 = vsel %vm65, %v54, 0
    %143 = vmatprep.subr.bf16.mxu0 0
    %144 = vmatpush1.bf16.msra.mxu0 0
    %145 = vmatprep.subr.bf16.mxu0 0
    %146 = vmatpush1.bf16.msra.mxu0 0
    %147 = vmatprep.subr.bf16.mxu0 0
    %148 = vmatpush1.bf16.msra.mxu0 0
    %149 = vmatprep.subr.bf16.mxu0 0
    %150 = vmatpush1.bf16.msra.mxu0 0
    %151 = vmatprep.subr.bf16.mxu0 0
    %152 = vmatpush1.bf16.msra.mxu0 0
    %153 = vmatprep.subr.bf16.mxu0 0
    %154 = vmatpush1.bf16.msra.mxu0 0
    %155 = vmatprep.subr.bf16.mxu0 0
    %156 = vmatpush1.bf16.msra.mxu0 0
    %157 = vmatprep.subr.bf16.mxu0 0
    %158 = vmatpush1.bf16.msra.mxu0 %v139
    %159 = vmatprep.subr.bf16.mxu0 0
    %160 = vmatpush2.bf16.msra.mxu0 0
    %161 = vmatprep.subr.bf16.mxu0 0
    %162 = vmatpush2.bf16.msra.mxu0 0
    %163 = vmatprep.subr.bf16.mxu0 0
    %164 = vmatpush2.bf16.msra.mxu0 0
    %165 = vmatprep.subr.bf16.mxu0 0
    %166 = vmatpush2.bf16.msra.mxu0 0
    %167 = vmatprep.subr.bf16.mxu0 0
    %168 = vmatpush2.bf16.msra.mxu0 0
    %169 = vmatprep.subr.bf16.mxu0 0
    %170 = vmatpush2.bf16.msra.mxu0 0
    %171 = vmatprep.subr.bf16.mxu0 0
    %172 = vmatpush2.bf16.msra.mxu0 0
    %173 = vmatprep.subr.bf16.mxu0 0
    %174 = vmatpush2.bf16.msra.mxu0 0
    %175 = vmatprep.mubr.bf16.mxu0 0
    %176 = vmatmul.mubr.bf16.gmra.mxu0 %v141
    %v177 = vpop.f32.mrf.mxu0
    %v178 = vadd.f32 %v72, %v177
    %v179 = vpop.f32.mrf.mxu0
    %v180 = vpop.f32.mrf.mxu0
    %v181 = vpop.f32.mrf.mxu0
    %182 = vdwg.mxu0
    %v183 = vmul.f32 %v178, %v70
    %v184 = vpack.c.bf16 %v183, %v183
    %v185 = vld [vmem:[%s4] sm:$0x3]
    %v186 = vld [vmem:[%s5] sm:$0x1]
    %v188 = vlaneseq
    %v189 = vshrl.u32 %v188, 7
    %v190 = vsub.s32 0, %v189
    %v191 = vrot.slane %v186, %v190
    %vm193 = vcmask 31744
    %v195 = vsel %vm193, %v184, 0
    %vm197 = vcmask 1041408
    %v199 = vsel %vm197, %v185, 0
    %201 = vmatprep.subr.bf16.mxu0 0
    %202 = vmatpush1.bf16.msra.mxu0 0
    %203 = vmatprep.subr.bf16.mxu0 0
    %204 = vmatpush1.bf16.msra.mxu0 0
    %205 = vmatprep.subr.bf16.mxu0 0
    %206 = vmatpush1.bf16.msra.mxu0 0
    %207 = vmatprep.subr.bf16.mxu0 0
    %208 = vmatpush1.bf16.msra.mxu0 0
    %209 = vmatprep.subr.bf16.mxu0 0
    %210 = vmatpush1.bf16.msra.mxu0 0
    %211 = vmatprep.subr.bf16.mxu0 0
    %212 = vmatpush1.bf16.msra.mxu0 0
    %213 = vmatprep.subr.bf16.mxu0 0
    %214 = vmatpush1.bf16.msra.mxu0 0
    %215 = vmatprep.subr.bf16.mxu0 0
    %216 = vmatpush1.bf16.msra.mxu0 %v199
    %217 = vmatprep.subr.bf16.mxu0 0
    %218 = vmatpush2.bf16.msra.mxu0 0
    %219 = vmatprep.subr.bf16.mxu0 0
    %220 = vmatpush2.bf16.msra.mxu0 0
    %221 = vmatprep.subr.bf16.mxu0 0
    %222 = vmatpush2.bf16.msra.mxu0 0
    %223 = vmatprep.subr.bf16.mxu0 0
    %224 = vmatpush2.bf16.msra.mxu0 0
    %225 = vmatprep.subr.bf16.mxu0 0
    %226 = vmatpush2.bf16.msra.mxu0 0
    %227 = vmatprep.subr.bf16.mxu0 0
    %228 = vmatpush2.bf16.msra.mxu0 0
    %229 = vmatprep.subr.bf16.mxu0 0
    %230 = vmatpush2.bf16.msra.mxu0 0
    %231 = vmatprep.subr.bf16.mxu0 0
    %232 = vmatpush2.bf16.msra.mxu0 0
    %233 = vmatprep.mubr.bf16.mxu0 0
    %234 = vmatmul.mubr.bf16.gmra.mxu0 %v195
    %v235 = vpop.f32.mrf.mxu0
    %v236 = vadd.f32 %v191, %v235
    %v237 = vpop.f32.mrf.mxu0
    %v238 = vpop.f32.mrf.mxu0
    %v239 = vpop.f32.mrf.mxu0
    %240 = vdwg.mxu0
    %v241 = vmax.f32 %v236, 0.0
    %vm242 = vcmask 261120
    %v243 = vsel %vm242, %v241, 0.0
    %244 = vadd.xlane.f32.xlu0 %v243
    %v245 = vpop.xlane.xlu0 %244
    %v246 = vrot.slane %v245, 4
    %v247 = vadd.f32 %v245, %v246
    %v248 = vrot.slane %v247, 2
    %v249 = vadd.f32 %v247, %v248
    %v250 = vrot.slane %v249, 1
    %v251 = vadd.f32 %v249, %v250
    %v252 = vmul.f32 %v251, 0.00390625
    %v253 = vsub.f32 %v241, %v252
    %v254 = vmul.f32 %v253, %v253
    %v255 = vsel %vm242, %v254, 0.0
    %256 = vadd.xlane.f32.xlu0 %v255
    %v257 = vpop.xlane.xlu0 %256
    %v258 = vrot.slane %v257, 4
    %v259 = vadd.f32 %v257, %v258
    %v260 = vrot.slane %v259, 2
    %v261 = vadd.f32 %v259, %v260
    %v262 = vrot.slane %v261, 1
    %v263 = vadd.f32 %v261, %v262
    %v264 = vmul.f32 %v263, 0.00390625
    %v265 = vrsqrt.pop %v264
    %v266 = vmul.f32 %v264, %v265
    %vm267 = vcmp.eq.f32.partialorder %v264, inf
    %v268 = vsel %vm267, %v264, %v266
    %vm269 = vcmp.eq.f32.partialorder %v264, 0.0
    %v270 = vand.u32 %v264, 2147483648
    %v271 = vsel %vm269, %v270, %v268
    %v272 = vadd.f32 %v271, 1e-05
    %v273 = vrcp.pop %v272
    %v274 = vmul.f32 %v253, %v273
    %v275 = vld [vmem:[%s6] sm:$0x1]
    %v277 = vlaneseq
    %v278 = vshrl.u32 %v277, 7
    %v279 = vsub.s32 0, %v278
    %v280 = vrot.slane %v275, %v279
    %v282 = vmul.f32 %v274, %v280
    %v283 = vld [vmem:[%s7] sm:$0x1]
    %v285 = vlaneseq
    %v286 = vshrl.u32 %v285, 7
    %v287 = vsub.s32 0, %v286
    %v288 = vrot.slane %v283, %v287
    %v290 = vadd.f32 %v282, %v288
    %v291 = vsel %vm242, %v290, 0.0
    %v292 = vrot.slane %v291, 4
    %v293 = vadd.f32 %v291, %v292
    %v294 = vrot.slane %v293, 2
    %v295 = vadd.f32 %v293, %v294
    %v296 = vrot.slane %v295, 1
    %v297 = vadd.f32 %v295, %v296
    %v298 = vpack.c.bf16 %v297, %v297
    %v299 = vld [vmem:[%s8] sm:$0xf]
    %v300 = vld [vmem:[%s8 + $0x4] sm:$0xf]
    %v301 = vld [vmem:[%s8 + $0x8] sm:$0xf]
    %v302 = vld [vmem:[%s8 + $0xc] sm:$0xf]
    %v303 = vld [vmem:[%s9] sm:$0x1]
    %v308 = vunpack.c.l.b16 %v299
    %v309 = vunpack.c.l.b16 %v300
    %v310 = vunpack.c.l.b16 %v301
    %v311 = vunpack.c.l.b16 %v302
    %v312 = vpack.c.b16 %v309, %v308
    %v313 = vpack.c.b16 %v311, %v310
    %v317 = vsel %vm242, %v298, 0
    %319 = vmatprep.subr.bf16.mxu0 0
    %320 = vmatpush1.bf16.msra.mxu0 0
    %321 = vmatprep.subr.bf16.mxu0 0
    %322 = vmatpush1.bf16.msra.mxu0 0
    %323 = vmatprep.subr.bf16.mxu0 0
    %324 = vmatpush1.bf16.msra.mxu0 0
    %325 = vmatprep.subr.bf16.mxu0 0
    %326 = vmatpush1.bf16.msra.mxu0 0
    %327 = vmatprep.subr.bf16.mxu0 0
    %328 = vmatpush1.bf16.msra.mxu0 0
    %329 = vmatprep.subr.bf16.mxu0 0
    %330 = vmatpush1.bf16.msra.mxu0 0
    %331 = vmatprep.subr.bf16.mxu0 0
    %332 = vmatpush1.bf16.msra.mxu0 %v313
    %333 = vmatprep.subr.bf16.mxu0 0
    %334 = vmatpush1.bf16.msra.mxu0 %v312
    %335 = vmatprep.subr.bf16.mxu0 0
    %336 = vmatpush2.bf16.msra.mxu0 0
    %337 = vmatprep.subr.bf16.mxu0 0
    %338 = vmatpush2.bf16.msra.mxu0 0
    %339 = vmatprep.subr.bf16.mxu0 0
    %340 = vmatpush2.bf16.msra.mxu0 0
    %341 = vmatprep.subr.bf16.mxu0 0
    %342 = vmatpush2.bf16.msra.mxu0 0
    %343 = vmatprep.subr.bf16.mxu0 0
    %344 = vmatpush2.bf16.msra.mxu0 0
    %345 = vmatprep.subr.bf16.mxu0 0
    %346 = vmatpush2.bf16.msra.mxu0 0
    %347 = vmatprep.subr.bf16.mxu0 0
    %348 = vmatpush2.bf16.msra.mxu0 0
    %349 = vmatprep.subr.bf16.mxu0 0
    %350 = vmatpush2.bf16.msra.mxu0 0
    %351 = vmatprep.mubr.bf16.mxu0 0
    %352 = vmatmul.mubr.bf16.gmra.mxu0 %v317
    %v353 = vpop.f32.mrf.mxu0
    %v354 = vadd.f32 %v303, %v353
    %v355 = vpop.f32.mrf.mxu0
    %v356 = vpop.f32.mrf.mxu0
    %v357 = vpop.f32.mrf.mxu0
    %358 = vdwg.mxu0
    %v359 = vmax.f32 %v354, 0.0
    %v360 = vpack.c.bf16 %v359, %v359
    %v361 = vld [vmem:[%s10] sm:$0xf]
    %v362 = vld [vmem:[%s10 + $0x4] sm:$0xf]
    %v363 = vld [vmem:[%s10 + $0x8] sm:$0xf]
    %v364 = vld [vmem:[%s10 + $0xc] sm:$0xf]
    %v365 = vld [vmem:[%s11] sm:$0x1]
    %v370 = vunpack.c.l.b16 %v361
    %v371 = vunpack.c.l.b16 %v362
    %v372 = vunpack.c.l.b16 %v363
    %v373 = vunpack.c.l.b16 %v364
    %v374 = vpack.c.b16 %v371, %v370
    %v375 = vpack.c.b16 %v373, %v372
    %v379 = vsel %vm242, %v360, 0
    %381 = vmatprep.subr.bf16.mxu0 0
    %382 = vmatpush1.bf16.msra.mxu0 0
    %383 = vmatprep.subr.bf16.mxu0 0
    %384 = vmatpush1.bf16.msra.mxu0 0
    %385 = vmatprep.subr.bf16.mxu0 0
    %386 = vmatpush1.bf16.msra.mxu0 0
    %387 = vmatprep.subr.bf16.mxu0 0
    %388 = vmatpush1.bf16.msra.mxu0 0
    %389 = vmatprep.subr.bf16.mxu0 0
    %390 = vmatpush1.bf16.msra.mxu0 0
    %391 = vmatprep.subr.bf16.mxu0 0
    %392 = vmatpush1.bf16.msra.mxu0 0
    %393 = vmatprep.subr.bf16.mxu0 0
    %394 = vmatpush1.bf16.msra.mxu0 %v375
    %395 = vmatprep.subr.bf16.mxu0 0
    %396 = vmatpush1.bf16.msra.mxu0 %v374
    %397 = vmatprep.subr.bf16.mxu0 0
    %398 = vmatpush2.bf16.msra.mxu0 0
    %399 = vmatprep.subr.bf16.mxu0 0
    %400 = vmatpush2.bf16.msra.mxu0 0
    %401 = vmatprep.subr.bf16.mxu0 0
    %402 = vmatpush2.bf16.msra.mxu0 0
    %403 = vmatprep.subr.bf16.mxu0 0
    %404 = vmatpush2.bf16.msra.mxu0 0
    %405 = vmatprep.subr.bf16.mxu0 0
    %406 = vmatpush2.bf16.msra.mxu0 0
    %407 = vmatprep.subr.bf16.mxu0 0
    %408 = vmatpush2.bf16.msra.mxu0 0
    %409 = vmatprep.subr.bf16.mxu0 0
    %410 = vmatpush2.bf16.msra.mxu0 0
    %411 = vmatprep.subr.bf16.mxu0 0
    %412 = vmatpush2.bf16.msra.mxu0 0
    %413 = vmatprep.mubr.bf16.mxu0 0
    %414 = vmatmul.mubr.bf16.gmra.mxu0 %v379
    %v415 = vpop.f32.mrf.mxu0
    %v416 = vadd.f32 %v365, %v415
    %v417 = vpop.f32.mrf.mxu0
    %v418 = vpop.f32.mrf.mxu0
    %v419 = vpop.f32.mrf.mxu0
    %420 = vdwg.mxu0
    %s421 = sld [smem:[#allocation2]]
    %v422 = vtanh.pop %v416
    %v423 = vstv %s421
    %v424 = vmul.f32 %v423, %v422
    %vm425 = vcmask 24576
    %426 = vst.msk [vmem:[#allocation3] sm:$0x1] %vm425, %v424
    // Predicated region
    $region50: #{tpu_custom_call.1} parent=1 // pred_check
      _
    $region51: #{tpu_custom_call.1} parent=1 // pred_check_branch
      %428 = sbr.rel (0) target = $region53
    $region52: #{tpu_custom_call.1} parent=1 // pred_region
      %s430 = ssub.s32 16, 16
      %431 = vsyncadd [#allocation4], %s430
      %s433 = sshll.u32 [#allocation3], 4
      %s434 = int_to_ptr.vmem [resolvable:$true] %s433
      %436 = dma.vmem_to_hbm [thread:$0]  %s434, 16, %s12, [#allocation4]
    $region53: #{tpu_custom_call.1} parent=1 // pred_fallthru
      _
    // Predicated region
    $region54: #{tpu_custom_call.1} parent=1 // pred_check
      _
    $region55: #{tpu_custom_call.1} parent=1 // pred_check_branch
      %438 = sbr.rel (0) target = $region57
    $region56: #{tpu_custom_call.1} parent=1 // pred_region
      %439 = dma.done [#allocation4], 16
    $region57: #{tpu_custom_call.1} parent=1 // pred_fallthru
      _
    %440 = vsyncpa [#allocation4], 1

</llo_original>
